<compile_context>
chip_gen: v7x
topology: tpu7x:2x2x1
jax: 0.10.0
libtpu: 0.0.40
codegen_flags: <defaults>
</compile_context>

<pallas_src>
import numpy as np
import jax
import jax.numpy as jnp
from jax.experimental import pallas as pl
from jax.experimental.pallas import tpu as pltpu

# ----------------------------- synthetic config -----------------------------
PYRAMID_LAYERS = ["x1", "x2"]
PATHWAYS = ["none"]                       # is_pyramid == False
CHANNEL_DICT = {"x1": 4, "x2": 8}
SPATIAL = {"x1": 16, "x2": 8}             # H == W
FIRST_CONV_SIZE = 8
SPP_LEVELS = [1, 2]                       # -> [(1,1), (2,2)], 'avg' pooling mode
FC_HIDDEN_DIM = 32
OUTPUT_SIZE = 16
PLANES = {k: min(v, FIRST_CONV_SIZE) for k, v in CHANNEL_DICT.items()}
NUM_POOL = sum(l * l for l in SPP_LEVELS)                                  # 5
HIDDEN_TOTAL = FC_HIDDEN_DIM * len(PYRAMID_LAYERS) * len(PATHWAYS)         # 64


# ------------------------------- Pallas kernel -------------------------------
def neck_kernel(x_ref, w_ref, b_ref, wf_ref, o_ref):
    """Whole I2DNeck forward: 2 MXU dots + f32 bias adds + ReLU, all VMEM-resident.

    x_ref  : (B, 1536) bf16   concat of both layers' NCHW-flattened features
    w_ref  : (1536, 64) bf16  block-diag fold of [pool+flatten][1x1 conv][ch_response]
    b_ref  : (1, 80)    f32   [hidden bias (64) | final bias (16)] packed in one row
    wf_ref : (64, 16)   f32   final_fc weight (unsplit; concat order == PYRAMID_LAYERS)
    """
    b = b_ref[...]
    # fused per-layer chain (both layers at once): bf16 MXU dot, f32 accumulation
    h = jnp.dot(x_ref[...], w_ref[...], preferred_element_type=jnp.float32)
    h = jnp.maximum(h + b[:, :HIDDEN_TOTAL], 0.0)          # f32 VALU (v5e-safe)
    # final_fusions (concat already implicit in column layout) + final_fc Linear
    o_ref[...] = (jnp.dot(h, wf_ref[...], preferred_element_type=jnp.float32)
                  + b[:, HIDDEN_TOTAL:])


def run_neck(x1, x2, w_comb, b_packed, wf):
    """Single grid-less pallas_call; concat/cast of the two feature maps is one tiny
    fused XLA op in front of the kernel."""
    B = x1.shape[0]
    x_cat = jnp.concatenate([x1.reshape(B, -1), x2.reshape(B, -1)],
                            axis=1).astype(jnp.bfloat16)
    vmem = pl.BlockSpec(memory_space=pltpu.MemorySpace.VMEM)
    return pl.pallas_call(
        neck_kernel,
        out_shape=jax.ShapeDtypeStruct((B, OUTPUT_SIZE), jnp.float32),
        in_specs=[vmem, vmem, vmem, vmem],
        out_specs=vmem,
    )(x_cat, w_comb, b_packed, wf)


run_neck_jit = jax.jit(run_neck)


# ------------------------------- glue helpers ---------------------------------
def build_pool_matrix(hw, levels):
    """(NP, H*W) matrix s.t. P @ y_flat == adaptive_avg_pool per SPP level.
    Rows: level-major, (i, j) row-major within a level.  Matches PyTorch
    adaptive_avg_pool2d when H, W are divisible by the level (true here)."""
    H = W = hw
    P = np.zeros((sum(l * l for l in levels), H * W), dtype=np.float64)
    r = 0
    for lvl in levels:
        hs, ws = H // lvl, W // lvl
        for i in range(lvl):
            for j in range(lvl):
                for hh in range(i * hs, (i + 1) * hs):
                    P[r, hh * W + j * ws: hh * W + (j + 1) * ws] = 1.0 / (hs * ws)
                r += 1
    return P


def spp_fc_permute(wfull, C, levels):
    """Permute an FC weight whose input rows follow the PyTorch SPP flatten order
    ([per level: channel-major (c, i, j)]) into pooled order
    ([per pooled position r (level-major): channels c])."""
    rows = []
    off = 0
    for lvl in levels:
        npos = lvl * lvl
        blk = wfull[off:off + C * npos].reshape(C, npos, -1)   # (C, npos, hidden)
        for p in range(npos):
            rows.append(blk[:, p, :])                          # (C, hidden)
        off += C * npos
    return np.concatenate(rows, axis=0)                        # (NP*C, hidden)


def fold_layer(name, w1, b1, wfc_full, bfc):
    """Collapse [SPP pool+flatten] -> [1x1 conv] -> [ch_response FC] for one layer
    into a single (Cin*H*W, hidden) weight and (1, hidden) bias (float64 host math).
    Exact: avg-pool rows sum to 1, so the conv (and its bias) commutes with pooling."""
    Cin, hw = CHANNEL_DICT[name], SPATIAL[name]
    Cout = PLANES[name]
    S = hw * hw
    pmat = build_pool_matrix(hw, SPP_LEVELS)                         # (NP, S)

    # pooling + SPP flatten acting on NCHW-flattened input -> pooled order (r, c)
    wpool = np.zeros((Cin * S, NUM_POOL * Cin), dtype=np.float64)
    for ci in range(Cin):
        for r in range(NUM_POOL):
            wpool[ci * S:(ci + 1) * S, r * Cin + ci] = pmat[r]

    # block-diagonal 1x1 conv applied after pooling
    w1np = np.asarray(w1, dtype=np.float64)                          # (Cin, Cout)
    wconv = np.zeros((NUM_POOL * Cin, NUM_POOL * Cout), dtype=np.float64)
    for r in range(NUM_POOL):
        wconv[r * Cin:(r + 1) * Cin, r * Cout:(r + 1) * Cout] = w1np
    bconv = np.tile(np.asarray(b1, np.float64).reshape(1, Cout), (1, NUM_POOL))

    # ch_response FC, rows permuted from PyTorch SPP order to pooled order
    wfcp = spp_fc_permute(np.asarray(wfc_full, np.float64), Cout, SPP_LEVELS)
    bfc64 = np.asarray(bfc, np.float64)

    W = wpool @ wconv @ wfcp                                         # (Cin*S, hidden)
    b = bconv @ wfcp + bfc64                                         # (1, hidden)
    return W, b


def init_linear(key, fan_in, fan_out):
    """Deterministic PyTorch-style uniform(-1/sqrt(fan_in), 1/sqrt(fan_in)) init."""
    k1, k2 = jax.random.split(key)
    bound = 1.0 / float(np.sqrt(fan_in))
    w = jax.random.uniform(k1, (fan_in, fan_out), jnp.float32, -bound, bound)
    b = jax.random.uniform(k2, (1, fan_out), jnp.float32, -bound, bound)
    return w, b


def reference_forward(inputs, raw_params):
    """Pure-JAX f32 mirror of the original module path: 1x1 conv -> SPP avg pool ->
    Linear+ReLU per layer -> concat -> final Linear."""
    hidden = []
    for name in PYRAMID_LAYERS:
        w1, b1, wfc_full, bfc = raw_params[name]
        x = inputs[name]                                              # (B, Cin, H, W)
        y = jnp.einsum("bchw,cd->bdhw", x, w1) + b1.reshape(1, -1, 1, 1)
        B_, C_, H_, W_ = y.shape
        feats = []
        for lvl in SPP_LEVELS:
            p = y.reshape(B_, C_, lvl, H_ // lvl, lvl, W_ // lvl).mean(axis=(3, 5))
            feats.append(p.reshape(B_, C_ * lvl * lvl))               # channel-major flatten
        spp = jnp.concatenate(feats, axis=1)
        hidden.append(jnp.maximum(spp @ wfc_full + bfc, 0.0))
    fused = jnp.concatenate(hidden, axis=1)
    wf, bf = raw_params["final"]
    return fused @ wf + bf


# ---------------------------------- main ---------------------------------------
if __name__ == "__main__":
    B = 2
    keys = jax.random.split(jax.random.PRNGKey(0), 16)
    kidx = 0

    # Backbone features, NCHW (as in the PyTorch forward's input dict)
    inputs = {}
    for name in PYRAMID_LAYERS:
        C, hw = CHANNEL_DICT[name], SPATIAL[name]
        inputs[name] = jax.random.normal(keys[kidx], (B, C, hw, hw), jnp.float32)
        kidx += 1

    # Raw (PyTorch-layout) weights + per-layer folded slabs
    raw_params = {}
    layer_w, layer_b = [], []
    for name in PYRAMID_LAYERS:
        Cin, Cout = CHANNEL_DICT[name], PLANES[name]
        w1, b1 = init_linear(keys[kidx], Cin, Cout); kidx += 1          # 1x1 conv
        wfc_full, bfc = init_linear(keys[kidx], Cout * NUM_POOL, FC_HIDDEN_DIM); kidx += 1
        raw_params[name] = (w1, b1, wfc_full, bfc)
        W, bl = fold_layer(name, w1, b1, wfc_full, bfc)
        layer_w.append(W); layer_b.append(bl)

    wf, bf = init_linear(keys[kidx], HIDDEN_TOTAL, OUTPUT_SIZE); kidx += 1
    raw_params["final"] = (wf, bf)

    # Block-diagonal combined weight over both layers + single packed bias row.
    # Column order [x1 | x2] matches PYRAMID_LAYERS / the concat in the reference.
    D1, D2 = layer_w[0].shape[0], layer_w[1].shape[0]                    # 1024, 512
    Wcomb = np.zeros((D1 + D2, HIDDEN_TOTAL), dtype=np.float64)
    Wcomb[:D1, :FC_HIDDEN_DIM] = layer_w[0]
    Wcomb[D1:, FC_HIDDEN_DIM:] = layer_w[1]
    b_packed = np.concatenate(
        [layer_b[0], layer_b[1], np.asarray(bf, np.float64)], axis=1)   # (1, 80)

    w_comb_j = jnp.asarray(Wcomb, dtype=jnp.bfloat16)   # bf16 MXU operand, half the DMA bytes
    b_packed_j = jnp.asarray(b_packed, dtype=jnp.float32)
    wf_j = jnp.asarray(wf, dtype=jnp.float32)

    out = run_neck_jit(inputs["x1"], inputs["x2"], w_comb_j, b_packed_j, wf_j)
    out = jax.block_until_ready(out)

    ref = reference_forward(inputs, raw_params)
    assert out.shape == (B, OUTPUT_SIZE), out.shape
    assert bool(jnp.all(jnp.isfinite(out)))
    # Tolerance loosened for bf16 inputs/weights on the first dot (f32 accumulation).
    assert bool(jnp.allclose(out, ref, atol=2e-2, rtol=2e-2)), \
        float(jnp.max(jnp.abs(out - ref)))
    print("KERNEL_OK")
</pallas_src>

<mosaic_0001>
module attributes {stable_mosaic.version = 11 : i64} {
  func.func @neck_kernel(%arg0: memref<2x1536xbf16, #tpu.memory_space<vmem>>, %arg1: memref<1536x64xbf16, #tpu.memory_space<vmem>>, %arg2: memref<1x80xf32, #tpu.memory_space<vmem>>, %arg3: memref<64x16xf32, #tpu.memory_space<vmem>>, %arg4: memref<2x16xf32, #tpu.memory_space<vmem>>) attributes {dimension_semantics = [], scalar_prefetch = 0 : i64, scratch_operands = 0 : i64, tpu.core_type = #tpu.core_type<tc>} {
    %c0 = arith.constant 0 : index
    %c0_0 = arith.constant 0 : index
    %0 = vector.load %arg2[%c0, %c0_0] : memref<1x80xf32, #tpu.memory_space<vmem>>, vector<1x80xf32>
    %c0_1 = arith.constant 0 : index
    %c0_2 = arith.constant 0 : index
    %1 = vector.load %arg0[%c0_1, %c0_2] : memref<2x1536xbf16, #tpu.memory_space<vmem>>, vector<2x1536xbf16>
    %c0_3 = arith.constant 0 : index
    %c0_4 = arith.constant 0 : index
    %2 = vector.load %arg1[%c0_3, %c0_4] : memref<1536x64xbf16, #tpu.memory_space<vmem>>, vector<1536x64xbf16>
    %cst = arith.constant dense<0.000000e+00> : vector<2x64xf32>
    %3 = tpu.matmul %1, %2, %cst {dimension_numbers = #tpu.dot_dimension_numbers<[1], [0], [0], [1], [0, 0, 1, 1], [], []>} : vector<2x1536xbf16>, vector<1536x64xbf16>, vector<2x64xf32> -> vector<2x64xf32>
    %4 = vector.extract_strided_slice %0 {offsets = [0, 0], sizes = [1, 64], strides = [1, 1]} : vector<1x80xf32> to vector<1x64xf32>
    %5 = vector.broadcast %4 : vector<1x64xf32> to vector<2x64xf32>
    %6 = arith.addf %3, %5 : vector<2x64xf32>
    %cst_5 = arith.constant 0.000000e+00 : f32
    %7 = vector.broadcast %cst_5 : f32 to vector<2x64xf32>
    %8 = arith.maximumf %6, %7 : vector<2x64xf32>
    %c0_6 = arith.constant 0 : index
    %c0_7 = arith.constant 0 : index
    %9 = vector.load %arg3[%c0_6, %c0_7] : memref<64x16xf32, #tpu.memory_space<vmem>>, vector<64x16xf32>
    %cst_8 = arith.constant dense<0.000000e+00> : vector<2x16xf32>
    %10 = tpu.matmul %8, %9, %cst_8 {dimension_numbers = #tpu.dot_dimension_numbers<[1], [0], [0], [1], [0, 0, 1, 1], [], []>} : vector<2x64xf32>, vector<64x16xf32>, vector<2x16xf32> -> vector<2x16xf32>
    %11 = vector.extract_strided_slice %0 {offsets = [0, 64], sizes = [1, 16], strides = [1, 1]} : vector<1x80xf32> to vector<1x16xf32>
    %12 = vector.broadcast %11 : vector<1x16xf32> to vector<2x16xf32>
    %13 = arith.addf %10, %12 : vector<2x16xf32>
    %c0_9 = arith.constant 0 : index
    %c0_10 = arith.constant 0 : index
    %14 = vector.load %arg4[%c0_9, %c0_10] : memref<2x16xf32, #tpu.memory_space<vmem>>, vector<2x16xf32>
    tpu.vector_store %arg4[%c0_9, %c0_10], %13 {strides = array<i32>} : memref<2x16xf32, #tpu.memory_space<vmem>>, vector<2x16xf32>,
    return
  }
}

</mosaic_0001>

<llo_original>
// kernel: run_neck.1
$region0: #{run_neck.1}
  #allocation0 [shape = 'u32[]', space=smem, size = 0x4, offset = 0x4, fixed_abs, tag = 'smem constant byte address 0x4 - core index']
  #allocation1 [shape = 'u32[144,128]{1,0:T(1,128)}', space=vmem, size = 0x12000, scoped, tag = 'internal scratch']
  %s0 = inlined_call_operand.vmem [shape: bf16[2,1536], index: 0, kind: input, shape index: {}]
  %s1 = inlined_call_operand.vmem [shape: bf16[1536,64], index: 1, kind: input, shape index: {}]
  %s2 = inlined_call_operand.vmem [shape: f32[1,80], index: 2, kind: input, shape index: {}]
  %s3 = inlined_call_operand.vmem [shape: f32[64,16], index: 3, kind: input, shape index: {}]
  %s4 = inlined_call_operand.hbm [shape: f32[2,16], index: 4, kind: output, shape index: {}]
  %s5 = sld [smem:[#allocation0]]
  $region26: #{run_neck.1} parent=0
    _
  %s7 = ssub.s32 1, %s5
  %s8 = scalar_select 0, %s7, %s5
  $region1: #{run_neck.1} parent=0
    #allocation2 [shape = 'u8[1024]{0}', space=vmem, size = 0x400, scoped, tag = 'output window, operand 0, single buffered']
    #allocation3 [shape = 's32[1]{0}', space=sflag, size = 0x4, scoped, tag = 'scoped memory for run_neck.1']
    %9 = vsyncpa [#allocation3], 0
    // Predicated region
    $region2: #{run_neck.1} parent=1 // pred_check
      _
    $region3: #{run_neck.1} parent=1 // pred_check_branch
      %11 = sbr.rel (0) target = $region5
    $region4: #{run_neck.1} parent=1 // pred_region
      _
    $region5: #{run_neck.1} parent=1 // pred_fallthru
      _
    // Predicated region
    $region6: #{run_neck.1} parent=1 // pred_check
      _
    $region7: #{run_neck.1} parent=1 // pred_check_branch
      %13 = sbr.rel (0) target = $region9
    $region8: #{run_neck.1} parent=1 // pred_region
      _
    $region9: #{run_neck.1} parent=1 // pred_fallthru
      _
    // Predicated region
    $region10: #{run_neck.1} parent=1 // pred_check
      _
    $region11: #{run_neck.1} parent=1 // pred_check_branch
      %15 = sbr.rel (0) target = $region13
    $region12: #{run_neck.1} parent=1 // pred_region
      _
    $region13: #{run_neck.1} parent=1 // pred_fallthru
      _
    // Predicated region
    $region14: #{run_neck.1} parent=1 // pred_check
      _
    $region15: #{run_neck.1} parent=1 // pred_check_branch
      %17 = sbr.rel (0) target = $region17
    $region16: #{run_neck.1} parent=1 // pred_region
      _
    $region17: #{run_neck.1} parent=1 // pred_fallthru
      _
    %v19 = vld [vmem:[%s2] sm:$0x1]
    %v20 = vld [vmem:[%s0] sm:$0xff]
    %v21 = vld [vmem:[%s0 + $0x8] sm:$0xf]
    %v22 = vld [vmem:[%s1] sm:$0xf]
    %v23 = vld [vmem:[%s1 + $0x4] sm:$0xf]
    %v24 = vld [vmem:[%s1 + $0x8] sm:$0xf]
    %v25 = vld [vmem:[%s1 + $0xc] sm:$0xf]
    %v26 = vld [vmem:[%s1 + $0x10] sm:$0xf]
    %v27 = vld [vmem:[%s1 + $0x14] sm:$0xf]
    %v28 = vld [vmem:[%s1 + $0x18] sm:$0xf]
    %v29 = vld [vmem:[%s1 + $0x1c] sm:$0xf]
    %v30 = vld [vmem:[%s1 + $0x20] sm:$0xf]
    %v31 = vld [vmem:[%s1 + $0x24] sm:$0xf]
    %v32 = vld [vmem:[%s1 + $0x28] sm:$0xf]
    %v33 = vld [vmem:[%s1 + $0x2c] sm:$0xf]
    %v34 = vld [vmem:[%s1 + $0x30] sm:$0xf]
    %v35 = vld [vmem:[%s1 + $0x34] sm:$0xf]
    %v36 = vld [vmem:[%s1 + $0x38] sm:$0xf]
    %v37 = vld [vmem:[%s1 + $0x3c] sm:$0xf]
    %v38 = vld [vmem:[%s1 + $0x40] sm:$0xf]
    %v39 = vld [vmem:[%s1 + $0x44] sm:$0xf]
    %v40 = vld [vmem:[%s1 + $0x48] sm:$0xf]
    %v41 = vld [vmem:[%s1 + $0x4c] sm:$0xf]
    %v42 = vld [vmem:[%s1 + $0x50] sm:$0xf]
    %v43 = vld [vmem:[%s1 + $0x54] sm:$0xf]
    %v44 = vld [vmem:[%s1 + $0x58] sm:$0xf]
    %v45 = vld [vmem:[%s1 + $0x5c] sm:$0xf]
    %v46 = vld [vmem:[%s1 + $0x60] sm:$0xf]
    %v47 = vld [vmem:[%s1 + $0x64] sm:$0xf]
    %v48 = vld [vmem:[%s1 + $0x68] sm:$0xf]
    %v49 = vld [vmem:[%s1 + $0x6c] sm:$0xf]
    %v50 = vld [vmem:[%s1 + $0x70] sm:$0xf]
    %v51 = vld [vmem:[%s1 + $0x74] sm:$0xf]
    %v52 = vld [vmem:[%s1 + $0x78] sm:$0xf]
    %v53 = vld [vmem:[%s1 + $0x7c] sm:$0xf]
    %v54 = vld [vmem:[%s1 + $0x80] sm:$0xf]
    %v55 = vld [vmem:[%s1 + $0x84] sm:$0xf]
    %v56 = vld [vmem:[%s1 + $0x88] sm:$0xf]
    %v57 = vld [vmem:[%s1 + $0x8c] sm:$0xf]
    %v58 = vld [vmem:[%s1 + $0x90] sm:$0xf]
    %v59 = vld [vmem:[%s1 + $0x94] sm:$0xf]
    %v60 = vld [vmem:[%s1 + $0x98] sm:$0xf]
    %v61 = vld [vmem:[%s1 + $0x9c] sm:$0xf]
    %v62 = vld [vmem:[%s1 + $0xa0] sm:$0xf]
    %v63 = vld [vmem:[%s1 + $0xa4] sm:$0xf]
    %v64 = vld [vmem:[%s1 + $0xa8] sm:$0xf]
    %v65 = vld [vmem:[%s1 + $0xac] sm:$0xf]
    %v66 = vld [vmem:[%s1 + $0xb0] sm:$0xf]
    %v67 = vld [vmem:[%s1 + $0xb4] sm:$0xf]
    %v68 = vld [vmem:[%s1 + $0xb8] sm:$0xf]
    %v69 = vld [vmem:[%s1 + $0xbc] sm:$0xf]
    %v70 = vld [vmem:[%s1 + $0xc0] sm:$0xf]
    %v71 = vld [vmem:[%s1 + $0xc4] sm:$0xf]
    %v72 = vld [vmem:[%s1 + $0xc8] sm:$0xf]
    %v73 = vld [vmem:[%s1 + $0xcc] sm:$0xf]
    %v74 = vld [vmem:[%s1 + $0xd0] sm:$0xf]
    %v75 = vld [vmem:[%s1 + $0xd4] sm:$0xf]
    %v76 = vld [vmem:[%s1 + $0xd8] sm:$0xf]
    %v77 = vld [vmem:[%s1 + $0xdc] sm:$0xf]
    %v78 = vld [vmem:[%s1 + $0xe0] sm:$0xf]
    %v79 = vld [vmem:[%s1 + $0xe4] sm:$0xf]
    %v80 = vld [vmem:[%s1 + $0xe8] sm:$0xf]
    %v81 = vld [vmem:[%s1 + $0xec] sm:$0xf]
    %v82 = vld [vmem:[%s1 + $0xf0] sm:$0xf]
    %v83 = vld [vmem:[%s1 + $0xf4] sm:$0xf]
    %v84 = vld [vmem:[%s1 + $0xf8] sm:$0xf]
    %v85 = vld [vmem:[%s1 + $0xfc] sm:$0xf]
    %v86 = vld [vmem:[%s1 + $0x100] sm:$0xf]
    %v87 = vld [vmem:[%s1 + $0x104] sm:$0xf]
    %v88 = vld [vmem:[%s1 + $0x108] sm:$0xf]
    %v89 = vld [vmem:[%s1 + $0x10c] sm:$0xf]
    %v90 = vld [vmem:[%s1 + $0x110] sm:$0xf]
    %v91 = vld [vmem:[%s1 + $0x114] sm:$0xf]
    %v92 = vld [vmem:[%s1 + $0x118] sm:$0xf]
    %v93 = vld [vmem:[%s1 + $0x11c] sm:$0xf]
    %v94 = vld [vmem:[%s1 + $0x120] sm:$0xf]
    %v95 = vld [vmem:[%s1 + $0x124] sm:$0xf]
    %v96 = vld [vmem:[%s1 + $0x128] sm:$0xf]
    %v97 = vld [vmem:[%s1 + $0x12c] sm:$0xf]
    %v98 = vld [vmem:[%s1 + $0x130] sm:$0xf]
    %v99 = vld [vmem:[%s1 + $0x134] sm:$0xf]
    %v100 = vld [vmem:[%s1 + $0x138] sm:$0xf]
    %v101 = vld [vmem:[%s1 + $0x13c] sm:$0xf]
    %v102 = vld [vmem:[%s1 + $0x140] sm:$0xf]
    %v103 = vld [vmem:[%s1 + $0x144] sm:$0xf]
    %v104 = vld [vmem:[%s1 + $0x148] sm:$0xf]
    %v105 = vld [vmem:[%s1 + $0x14c] sm:$0xf]
    %v106 = vld [vmem:[%s1 + $0x150] sm:$0xf]
    %v107 = vld [vmem:[%s1 + $0x154] sm:$0xf]
    %v108 = vld [vmem:[%s1 + $0x158] sm:$0xf]
    %v109 = vld [vmem:[%s1 + $0x15c] sm:$0xf]
    %v110 = vld [vmem:[%s1 + $0x160] sm:$0xf]
    %v111 = vld [vmem:[%s1 + $0x164] sm:$0xf]
    %v112 = vld [vmem:[%s1 + $0x168] sm:$0xf]
    %v113 = vld [vmem:[%s1 + $0x16c] sm:$0xf]
    %v114 = vld [vmem:[%s1 + $0x170] sm:$0xf]
    %v115 = vld [vmem:[%s1 + $0x174] sm:$0xf]
    %v116 = vld [vmem:[%s1 + $0x178] sm:$0xf]
    %v117 = vld [vmem:[%s1 + $0x17c] sm:$0xf]
    %v118 = vld [vmem:[%s1 + $0x180] sm:$0xf]
    %v119 = vld [vmem:[%s1 + $0x184] sm:$0xf]
    %v120 = vld [vmem:[%s1 + $0x188] sm:$0xf]
    %v121 = vld [vmem:[%s1 + $0x18c] sm:$0xf]
    %v122 = vld [vmem:[%s1 + $0x190] sm:$0xf]
    %v123 = vld [vmem:[%s1 + $0x194] sm:$0xf]
    %v124 = vld [vmem:[%s1 + $0x198] sm:$0xf]
    %v125 = vld [vmem:[%s1 + $0x19c] sm:$0xf]
    %v126 = vld [vmem:[%s1 + $0x1a0] sm:$0xf]
    %v127 = vld [vmem:[%s1 + $0x1a4] sm:$0xf]
    %v128 = vld [vmem:[%s1 + $0x1a8] sm:$0xf]
    %v129 = vld [vmem:[%s1 + $0x1ac] sm:$0xf]
    %v130 = vld [vmem:[%s1 + $0x1b0] sm:$0xf]
    %v131 = vld [vmem:[%s1 + $0x1b4] sm:$0xf]
    %v132 = vld [vmem:[%s1 + $0x1b8] sm:$0xf]
    %v133 = vld [vmem:[%s1 + $0x1bc] sm:$0xf]
    %v134 = vld [vmem:[%s1 + $0x1c0] sm:$0xf]
    %v135 = vld [vmem:[%s1 + $0x1c4] sm:$0xf]
    %v136 = vld [vmem:[%s1 + $0x1c8] sm:$0xf]
    %v137 = vld [vmem:[%s1 + $0x1cc] sm:$0xf]
    %v138 = vld [vmem:[%s1 + $0x1d0] sm:$0xf]
    %v139 = vld [vmem:[%s1 + $0x1d4] sm:$0xf]
    %v140 = vld [vmem:[%s1 + $0x1d8] sm:$0xf]
    %v141 = vld [vmem:[%s1 + $0x1dc] sm:$0xf]
    %v142 = vld [vmem:[%s1 + $0x1e0] sm:$0xf]
    %v143 = vld [vmem:[%s1 + $0x1e4] sm:$0xf]
    %v144 = vld [vmem:[%s1 + $0x1e8] sm:$0xf]
    %v145 = vld [vmem:[%s1 + $0x1ec] sm:$0xf]
    %v146 = vld [vmem:[%s1 + $0x1f0] sm:$0xf]
    %v147 = vld [vmem:[%s1 + $0x1f4] sm:$0xf]
    %v148 = vld [vmem:[%s1 + $0x1f8] sm:$0xf]
    %v149 = vld [vmem:[%s1 + $0x1fc] sm:$0xf]
    %v150 = vld [vmem:[%s1 + $0x200] sm:$0xf]
    %v151 = vld [vmem:[%s1 + $0x204] sm:$0xf]
    %v152 = vld [vmem:[%s1 + $0x208] sm:$0xf]
    %v153 = vld [vmem:[%s1 + $0x20c] sm:$0xf]
    %v154 = vld [vmem:[%s1 + $0x210] sm:$0xf]
    %v155 = vld [vmem:[%s1 + $0x214] sm:$0xf]
    %v156 = vld [vmem:[%s1 + $0x218] sm:$0xf]
    %v157 = vld [vmem:[%s1 + $0x21c] sm:$0xf]
    %v158 = vld [vmem:[%s1 + $0x220] sm:$0xf]
    %v159 = vld [vmem:[%s1 + $0x224] sm:$0xf]
    %v160 = vld [vmem:[%s1 + $0x228] sm:$0xf]
    %v161 = vld [vmem:[%s1 + $0x22c] sm:$0xf]
    %v162 = vld [vmem:[%s1 + $0x230] sm:$0xf]
    %v163 = vld [vmem:[%s1 + $0x234] sm:$0xf]
    %v164 = vld [vmem:[%s1 + $0x238] sm:$0xf]
    %v165 = vld [vmem:[%s1 + $0x23c] sm:$0xf]
    %v166 = vld [vmem:[%s1 + $0x240] sm:$0xf]
    %v167 = vld [vmem:[%s1 + $0x244] sm:$0xf]
    %v168 = vld [vmem:[%s1 + $0x248] sm:$0xf]
    %v169 = vld [vmem:[%s1 + $0x24c] sm:$0xf]
    %v170 = vld [vmem:[%s1 + $0x250] sm:$0xf]
    %v171 = vld [vmem:[%s1 + $0x254] sm:$0xf]
    %v172 = vld [vmem:[%s1 + $0x258] sm:$0xf]
    %v173 = vld [vmem:[%s1 + $0x25c] sm:$0xf]
    %v174 = vld [vmem:[%s1 + $0x260] sm:$0xf]
    %v175 = vld [vmem:[%s1 + $0x264] sm:$0xf]
    %v176 = vld [vmem:[%s1 + $0x268] sm:$0xf]
    %v177 = vld [vmem:[%s1 + $0x26c] sm:$0xf]
    %v178 = vld [vmem:[%s1 + $0x270] sm:$0xf]
    %v179 = vld [vmem:[%s1 + $0x274] sm:$0xf]
    %v180 = vld [vmem:[%s1 + $0x278] sm:$0xf]
    %v181 = vld [vmem:[%s1 + $0x27c] sm:$0xf]
    %v182 = vld [vmem:[%s1 + $0x280] sm:$0xf]
    %v183 = vld [vmem:[%s1 + $0x284] sm:$0xf]
    %v184 = vld [vmem:[%s1 + $0x288] sm:$0xf]
    %v185 = vld [vmem:[%s1 + $0x28c] sm:$0xf]
    %v186 = vld [vmem:[%s1 + $0x290] sm:$0xf]
    %v187 = vld [vmem:[%s1 + $0x294] sm:$0xf]
    %v188 = vld [vmem:[%s1 + $0x298] sm:$0xf]
    %v189 = vld [vmem:[%s1 + $0x29c] sm:$0xf]
    %v190 = vld [vmem:[%s1 + $0x2a0] sm:$0xf]
    %v191 = vld [vmem:[%s1 + $0x2a4] sm:$0xf]
    %v192 = vld [vmem:[%s1 + $0x2a8] sm:$0xf]
    %v193 = vld [vmem:[%s1 + $0x2ac] sm:$0xf]
    %v194 = vld [vmem:[%s1 + $0x2b0] sm:$0xf]
    %v195 = vld [vmem:[%s1 + $0x2b4] sm:$0xf]
    %v196 = vld [vmem:[%s1 + $0x2b8] sm:$0xf]
    %v197 = vld [vmem:[%s1 + $0x2bc] sm:$0xf]
    %v198 = vld [vmem:[%s1 + $0x2c0] sm:$0xf]
    %v199 = vld [vmem:[%s1 + $0x2c4] sm:$0xf]
    %v200 = vld [vmem:[%s1 + $0x2c8] sm:$0xf]
    %v201 = vld [vmem:[%s1 + $0x2cc] sm:$0xf]
    %v202 = vld [vmem:[%s1 + $0x2d0] sm:$0xf]
    %v203 = vld [vmem:[%s1 + $0x2d4] sm:$0xf]
    %v204 = vld [vmem:[%s1 + $0x2d8] sm:$0xf]
    %v205 = vld [vmem:[%s1 + $0x2dc] sm:$0xf]
    %v206 = vld [vmem:[%s1 + $0x2e0] sm:$0xf]
    %v207 = vld [vmem:[%s1 + $0x2e4] sm:$0xf]
    %v208 = vld [vmem:[%s1 + $0x2e8] sm:$0xf]
    %v209 = vld [vmem:[%s1 + $0x2ec] sm:$0xf]
    %v210 = vld [vmem:[%s1 + $0x2f0] sm:$0xf]
    %v211 = vld [vmem:[%s1 + $0x2f4] sm:$0xf]
    %v212 = vld [vmem:[%s1 + $0x2f8] sm:$0xf]
    %v213 = vld [vmem:[%s1 + $0x2fc] sm:$0xf]
    %v215 = vlaneseq
    %v216 = vshrl.u32 %v215, 7
    %v217 = vsub.s32 0, %v216
    %v218 = vrot.slane %v19, %v217
    %v222 = vcombine.high %v20, %v20
    %v224 = vunpack.c.l.s4 1966171168
    %v225 = vunpack.c.0.s8 %v224
    %v226 = vlaneseq
    %v227 = vshrl.u32 %v226, 7
    %v228 = vsub.s32 %v225, %v227
    %v229 = vrot.slane %v20, %v228
    %v231 = vunpack.c.l.s4 1966171168
    %v232 = vunpack.c.0.s8 %v231
    %v233 = vlaneseq
    %v234 = vshrl.u32 %v233, 7
    %v235 = vsub.s32 %v232, %v234
    %v236 = vrot.slane %v222, %v235
    %v237 = vcombine.high %v229, %v229
    %v238 = vcombine.high %v236, %v236
    %v240 = vunpack.c.l.s4 1966171168
    %v241 = vunpack.c.0.s8 %v240
    %v242 = vlaneseq
    %v243 = vshrl.u32 %v242, 7
    %v244 = vsub.s32 %v241, %v243
    %v245 = vrot.slane %v229, %v244
    %v247 = vunpack.c.l.s4 1966171168
    %v248 = vunpack.c.0.s8 %v247
    %v249 = vlaneseq
    %v250 = vshrl.u32 %v249, 7
    %v251 = vsub.s32 %v248, %v250
    %v252 = vrot.slane %v236, %v251
    %v254 = vunpack.c.l.s4 1966171168
    %v255 = vunpack.c.0.s8 %v254
    %v256 = vlaneseq
    %v257 = vshrl.u32 %v256, 7
    %v258 = vsub.s32 %v255, %v257
    %v259 = vrot.slane %v237, %v258
    %v261 = vunpack.c.l.s4 1966171168
    %v262 = vunpack.c.0.s8 %v261
    %v263 = vlaneseq
    %v264 = vshrl.u32 %v263, 7
    %v265 = vsub.s32 %v262, %v264
    %v266 = vrot.slane %v238, %v265
    %v267 = vcombine.high %v245, %v245
    %v268 = vcombine.high %v252, %v252
    %v269 = vcombine.high %v259, %v259
    %v270 = vcombine.high %v266, %v266
    %v272 = vunpack.c.l.s4 1966171168
    %v273 = vunpack.c.0.s8 %v272
    %v274 = vlaneseq
    %v275 = vshrl.u32 %v274, 7
    %v276 = vsub.s32 %v273, %v275
    %v277 = vrot.slane %v21, %v276
    %v278 = vcombine.high %v277, %v277
    %v280 = vunpack.c.l.s4 1966171168
    %v281 = vunpack.c.0.s8 %v280
    %v282 = vlaneseq
    %v283 = vshrl.u32 %v282, 7
    %v284 = vsub.s32 %v281, %v283
    %v285 = vrot.slane %v277, %v284
    %v287 = vunpack.c.l.s4 1966171168
    %v288 = vunpack.c.0.s8 %v287
    %v289 = vlaneseq
    %v290 = vshrl.u32 %v289, 7
    %v291 = vsub.s32 %v288, %v290
    %v292 = vrot.slane %v278, %v291
    %v293 = vcombine.high %v285, %v285
    %v294 = vcombine.high %v292, %v292
    %v499 = vunpack.c.l.b16 %v22
    %v500 = vunpack.c.l.b16 %v23
    %v501 = vunpack.c.l.b16 %v24
    %v502 = vunpack.c.l.b16 %v25
    %v503 = vunpack.c.l.b16 %v26
    %v504 = vunpack.c.l.b16 %v27
    %v505 = vunpack.c.l.b16 %v28
    %v506 = vunpack.c.l.b16 %v29
    %v507 = vunpack.c.l.b16 %v30
    %v508 = vunpack.c.l.b16 %v31
    %v509 = vunpack.c.l.b16 %v32
    %v510 = vunpack.c.l.b16 %v33
    %v511 = vunpack.c.l.b16 %v34
    %v512 = vunpack.c.l.b16 %v35
    %v513 = vunpack.c.l.b16 %v36
    %v514 = vunpack.c.l.b16 %v37
    %v515 = vunpack.c.l.b16 %v38
    %v516 = vunpack.c.l.b16 %v39
    %v517 = vunpack.c.l.b16 %v40
    %v518 = vunpack.c.l.b16 %v41
    %v519 = vunpack.c.l.b16 %v42
    %v520 = vunpack.c.l.b16 %v43
    %v521 = vunpack.c.l.b16 %v44
    %v522 = vunpack.c.l.b16 %v45
    %v523 = vunpack.c.l.b16 %v46
    %v524 = vunpack.c.l.b16 %v47
    %v525 = vunpack.c.l.b16 %v48
    %v526 = vunpack.c.l.b16 %v49
    %v527 = vunpack.c.l.b16 %v50
    %v528 = vunpack.c.l.b16 %v51
    %v529 = vunpack.c.l.b16 %v52
    %v530 = vunpack.c.l.b16 %v53
    %v531 = vunpack.c.l.b16 %v54
    %v532 = vunpack.c.l.b16 %v55
    %v533 = vunpack.c.l.b16 %v56
    %v534 = vunpack.c.l.b16 %v57
    %v535 = vunpack.c.l.b16 %v58
    %v536 = vunpack.c.l.b16 %v59
    %v537 = vunpack.c.l.b16 %v60
    %v538 = vunpack.c.l.b16 %v61
    %v539 = vunpack.c.l.b16 %v62
    %v540 = vunpack.c.l.b16 %v63
    %v541 = vunpack.c.l.b16 %v64
    %v542 = vunpack.c.l.b16 %v65
    %v543 = vunpack.c.l.b16 %v66
    %v544 = vunpack.c.l.b16 %v67
    %v545 = vunpack.c.l.b16 %v68
    %v546 = vunpack.c.l.b16 %v69
    %v547 = vunpack.c.l.b16 %v70
    %v548 = vunpack.c.l.b16 %v71
    %v549 = vunpack.c.l.b16 %v72
    %v550 = vunpack.c.l.b16 %v73
    %v551 = vunpack.c.l.b16 %v74
    %v552 = vunpack.c.l.b16 %v75
    %v553 = vunpack.c.l.b16 %v76
    %v554 = vunpack.c.l.b16 %v77
    %v555 = vunpack.c.l.b16 %v78
    %v556 = vunpack.c.l.b16 %v79
    %v557 = vunpack.c.l.b16 %v80
    %v558 = vunpack.c.l.b16 %v81
    %v559 = vunpack.c.l.b16 %v82
    %v560 = vunpack.c.l.b16 %v83
    %v561 = vunpack.c.l.b16 %v84
    %v562 = vunpack.c.l.b16 %v85
    %v563 = vunpack.c.l.b16 %v86
    %v564 = vunpack.c.l.b16 %v87
    %v565 = vunpack.c.l.b16 %v88
    %v566 = vunpack.c.l.b16 %v89
    %v567 = vunpack.c.l.b16 %v90
    %v568 = vunpack.c.l.b16 %v91
    %v569 = vunpack.c.l.b16 %v92
    %v570 = vunpack.c.l.b16 %v93
    %v571 = vunpack.c.l.b16 %v94
    %v572 = vunpack.c.l.b16 %v95
    %v573 = vunpack.c.l.b16 %v96
    %v574 = vunpack.c.l.b16 %v97
    %v575 = vunpack.c.l.b16 %v98
    %v576 = vunpack.c.l.b16 %v99
    %v577 = vunpack.c.l.b16 %v100
    %v578 = vunpack.c.l.b16 %v101
    %v579 = vunpack.c.l.b16 %v102
    %v580 = vunpack.c.l.b16 %v103
    %v581 = vunpack.c.l.b16 %v104
    %v582 = vunpack.c.l.b16 %v105
    %v583 = vunpack.c.l.b16 %v106
    %v584 = vunpack.c.l.b16 %v107
    %v585 = vunpack.c.l.b16 %v108
    %v586 = vunpack.c.l.b16 %v109
    %v587 = vunpack.c.l.b16 %v110
    %v588 = vunpack.c.l.b16 %v111
    %v589 = vunpack.c.l.b16 %v112
    %v590 = vunpack.c.l.b16 %v113
    %v591 = vunpack.c.l.b16 %v114
    %v592 = vunpack.c.l.b16 %v115
    %v593 = vunpack.c.l.b16 %v116
    %v594 = vunpack.c.l.b16 %v117
    %v595 = vunpack.c.l.b16 %v118
    %v596 = vunpack.c.l.b16 %v119
    %v597 = vunpack.c.l.b16 %v120
    %v598 = vunpack.c.l.b16 %v121
    %v599 = vunpack.c.l.b16 %v122
    %v600 = vunpack.c.l.b16 %v123
    %v601 = vunpack.c.l.b16 %v124
    %v602 = vunpack.c.l.b16 %v125
    %v603 = vunpack.c.l.b16 %v126
    %v604 = vunpack.c.l.b16 %v127
    %v605 = vunpack.c.l.b16 %v128
    %v606 = vunpack.c.l.b16 %v129
    %v607 = vunpack.c.l.b16 %v130
    %v608 = vunpack.c.l.b16 %v131
    %v609 = vunpack.c.l.b16 %v132
    %v610 = vunpack.c.l.b16 %v133
    %v611 = vunpack.c.l.b16 %v134
    %v612 = vunpack.c.l.b16 %v135
    %v613 = vunpack.c.l.b16 %v136
    %v614 = vunpack.c.l.b16 %v137
    %v615 = vunpack.c.l.b16 %v138
    %v616 = vunpack.c.l.b16 %v139
    %v617 = vunpack.c.l.b16 %v140
    %v618 = vunpack.c.l.b16 %v141
    %v619 = vunpack.c.l.b16 %v142
    %v620 = vunpack.c.l.b16 %v143
    %v621 = vunpack.c.l.b16 %v144
    %v622 = vunpack.c.l.b16 %v145
    %v623 = vunpack.c.l.b16 %v146
    %v624 = vunpack.c.l.b16 %v147
    %v625 = vunpack.c.l.b16 %v148
    %v626 = vunpack.c.l.b16 %v149
    %v627 = vunpack.c.l.b16 %v150
    %v628 = vunpack.c.l.b16 %v151
    %v629 = vunpack.c.l.b16 %v152
    %v630 = vunpack.c.l.b16 %v153
    %v631 = vunpack.c.l.b16 %v154
    %v632 = vunpack.c.l.b16 %v155
    %v633 = vunpack.c.l.b16 %v156
    %v634 = vunpack.c.l.b16 %v157
    %v635 = vunpack.c.l.b16 %v158
    %v636 = vunpack.c.l.b16 %v159
    %v637 = vunpack.c.l.b16 %v160
    %v638 = vunpack.c.l.b16 %v161
    %v639 = vunpack.c.l.b16 %v162
    %v640 = vunpack.c.l.b16 %v163
    %v641 = vunpack.c.l.b16 %v164
    %v642 = vunpack.c.l.b16 %v165
    %v643 = vunpack.c.l.b16 %v166
    %v644 = vunpack.c.l.b16 %v167
    %v645 = vunpack.c.l.b16 %v168
    %v646 = vunpack.c.l.b16 %v169
    %v647 = vunpack.c.l.b16 %v170
    %v648 = vunpack.c.l.b16 %v171
    %v649 = vunpack.c.l.b16 %v172
    %v650 = vunpack.c.l.b16 %v173
    %v651 = vunpack.c.l.b16 %v174
    %v652 = vunpack.c.l.b16 %v175
    %v653 = vunpack.c.l.b16 %v176
    %v654 = vunpack.c.l.b16 %v177
    %v655 = vunpack.c.l.b16 %v178
    %v656 = vunpack.c.l.b16 %v179
    %v657 = vunpack.c.l.b16 %v180
    %v658 = vunpack.c.l.b16 %v181
    %v659 = vunpack.c.l.b16 %v182
    %v660 = vunpack.c.l.b16 %v183
    %v661 = vunpack.c.l.b16 %v184
    %v662 = vunpack.c.l.b16 %v185
    %v663 = vunpack.c.l.b16 %v186
    %v664 = vunpack.c.l.b16 %v187
    %v665 = vunpack.c.l.b16 %v188
    %v666 = vunpack.c.l.b16 %v189
    %v667 = vunpack.c.l.b16 %v190
    %v668 = vunpack.c.l.b16 %v191
    %v669 = vunpack.c.l.b16 %v192
    %v670 = vunpack.c.l.b16 %v193
    %v671 = vunpack.c.l.b16 %v194
    %v672 = vunpack.c.l.b16 %v195
    %v673 = vunpack.c.l.b16 %v196
    %v674 = vunpack.c.l.b16 %v197
    %v675 = vunpack.c.l.b16 %v198
    %v676 = vunpack.c.l.b16 %v199
    %v677 = vunpack.c.l.b16 %v200
    %v678 = vunpack.c.l.b16 %v201
    %v679 = vunpack.c.l.b16 %v202
    %v680 = vunpack.c.l.b16 %v203
    %v681 = vunpack.c.l.b16 %v204
    %v682 = vunpack.c.l.b16 %v205
    %v683 = vunpack.c.l.b16 %v206
    %v684 = vunpack.c.l.b16 %v207
    %v685 = vunpack.c.l.b16 %v208
    %v686 = vunpack.c.l.b16 %v209
    %v687 = vunpack.c.l.b16 %v210
    %v688 = vunpack.c.l.b16 %v211
    %v689 = vunpack.c.l.b16 %v212
    %v690 = vunpack.c.l.b16 %v213
    %v691 = vpack.c.b16 %v500, %v499
    %v692 = vpack.c.b16 %v502, %v501
    %v693 = vpack.c.b16 %v504, %v503
    %v694 = vpack.c.b16 %v506, %v505
    %v695 = vpack.c.b16 %v508, %v507
    %v696 = vpack.c.b16 %v510, %v509
    %v697 = vpack.c.b16 %v512, %v511
    %v698 = vpack.c.b16 %v514, %v513
    %v699 = vpack.c.b16 %v516, %v515
    %v700 = vpack.c.b16 %v518, %v517
    %v701 = vpack.c.b16 %v520, %v519
    %v702 = vpack.c.b16 %v522, %v521
    %v703 = vpack.c.b16 %v524, %v523
    %v704 = vpack.c.b16 %v526, %v525
    %v705 = vpack.c.b16 %v528, %v527
    %v706 = vpack.c.b16 %v530, %v529
    %v707 = vpack.c.b16 %v532, %v531
    %v708 = vpack.c.b16 %v534, %v533
    %v709 = vpack.c.b16 %v536, %v535
    %v710 = vpack.c.b16 %v538, %v537
    %v711 = vpack.c.b16 %v540, %v539
    %v712 = vpack.c.b16 %v542, %v541
    %v713 = vpack.c.b16 %v544, %v543
    %v714 = vpack.c.b16 %v546, %v545
    %v715 = vpack.c.b16 %v548, %v547
    %v716 = vpack.c.b16 %v550, %v549
    %v717 = vpack.c.b16 %v552, %v551
    %v718 = vpack.c.b16 %v554, %v553
    %v719 = vpack.c.b16 %v556, %v555
    %v720 = vpack.c.b16 %v558, %v557
    %v721 = vpack.c.b16 %v560, %v559
    %v722 = vpack.c.b16 %v562, %v561
    %v723 = vpack.c.b16 %v564, %v563
    %v724 = vpack.c.b16 %v566, %v565
    %v725 = vpack.c.b16 %v568, %v567
    %v726 = vpack.c.b16 %v570, %v569
    %v727 = vpack.c.b16 %v572, %v571
    %v728 = vpack.c.b16 %v574, %v573
    %v729 = vpack.c.b16 %v576, %v575
    %v730 = vpack.c.b16 %v578, %v577
    %v731 = vpack.c.b16 %v580, %v579
    %v732 = vpack.c.b16 %v582, %v581
    %v733 = vpack.c.b16 %v584, %v583
    %v734 = vpack.c.b16 %v586, %v585
    %v735 = vpack.c.b16 %v588, %v587
    %v736 = vpack.c.b16 %v590, %v589
    %v737 = vpack.c.b16 %v592, %v591
    %v738 = vpack.c.b16 %v594, %v593
    %v739 = vpack.c.b16 %v596, %v595
    %v740 = vpack.c.b16 %v598, %v597
    %v741 = vpack.c.b16 %v600, %v599
    %v742 = vpack.c.b16 %v602, %v601
    %v743 = vpack.c.b16 %v604, %v603
    %v744 = vpack.c.b16 %v606, %v605
    %v745 = vpack.c.b16 %v608, %v607
    %v746 = vpack.c.b16 %v610, %v609
    %v747 = vpack.c.b16 %v612, %v611
    %v748 = vpack.c.b16 %v614, %v613
    %v749 = vpack.c.b16 %v616, %v615
    %v750 = vpack.c.b16 %v618, %v617
    %v751 = vpack.c.b16 %v620, %v619
    %v752 = vpack.c.b16 %v622, %v621
    %v753 = vpack.c.b16 %v624, %v623
    %v754 = vpack.c.b16 %v626, %v625
    %v755 = vpack.c.b16 %v628, %v627
    %v756 = vpack.c.b16 %v630, %v629
    %v757 = vpack.c.b16 %v632, %v631
    %v758 = vpack.c.b16 %v634, %v633
    %v759 = vpack.c.b16 %v636, %v635
    %v760 = vpack.c.b16 %v638, %v637
    %v761 = vpack.c.b16 %v640, %v639
    %v762 = vpack.c.b16 %v642, %v641
    %v763 = vpack.c.b16 %v644, %v643
    %v764 = vpack.c.b16 %v646, %v645
    %v765 = vpack.c.b16 %v648, %v647
    %v766 = vpack.c.b16 %v650, %v649
    %v767 = vpack.c.b16 %v652, %v651
    %v768 = vpack.c.b16 %v654, %v653
    %v769 = vpack.c.b16 %v656, %v655
    %v770 = vpack.c.b16 %v658, %v657
    %v771 = vpack.c.b16 %v660, %v659
    %v772 = vpack.c.b16 %v662, %v661
    %v773 = vpack.c.b16 %v664, %v663
    %v774 = vpack.c.b16 %v666, %v665
    %v775 = vpack.c.b16 %v668, %v667
    %v776 = vpack.c.b16 %v670, %v669
    %v777 = vpack.c.b16 %v672, %v671
    %v778 = vpack.c.b16 %v674, %v673
    %v779 = vpack.c.b16 %v676, %v675
    %v780 = vpack.c.b16 %v678, %v677
    %v781 = vpack.c.b16 %v680, %v679
    %v782 = vpack.c.b16 %v682, %v681
    %v783 = vpack.c.b16 %v684, %v683
    %v784 = vpack.c.b16 %v686, %v685
    %v785 = vpack.c.b16 %v688, %v687
    %v786 = vpack.c.b16 %v690, %v689
    %883 = vmatprep.subr.bf16.mxu0 0
    %884 = vmatpush1.bf16.msra.mxu0 %v691
    %885 = vmatprep.subr.bf16.mxu0 0
    %886 = vmatpush1.bf16.msra.mxu0 %v692
    %887 = vmatprep.subr.bf16.mxu0 0
    %888 = vmatpush1.bf16.msra.mxu0 %v693
    %889 = vmatprep.subr.bf16.mxu0 0
    %890 = vmatpush1.bf16.msra.mxu0 %v694
    %891 = vmatprep.subr.bf16.mxu0 0
    %892 = vmatpush1.bf16.msra.mxu0 %v695
    %893 = vmatprep.subr.bf16.mxu0 0
    %894 = vmatpush1.bf16.msra.mxu0 %v696
    %895 = vmatprep.subr.bf16.mxu0 0
    %896 = vmatpush1.bf16.msra.mxu0 %v697
    %897 = vmatprep.subr.bf16.mxu0 0
    %898 = vmatpush1.bf16.msra.mxu0 %v698
    %899 = vmatprep.subr.bf16.mxu0 0
    %900 = vmatpush1.bf16.msra.mxu0 %v699
    %901 = vmatprep.subr.bf16.mxu0 0
    %902 = vmatpush1.bf16.msra.mxu0 %v700
    %903 = vmatprep.subr.bf16.mxu0 0
    %904 = vmatpush1.bf16.msra.mxu0 %v701
    %905 = vmatprep.subr.bf16.mxu0 0
    %906 = vmatpush1.bf16.msra.mxu0 %v702
    %907 = vmatprep.subr.bf16.mxu0 0
    %908 = vmatpush1.bf16.msra.mxu0 %v703
    %909 = vmatprep.subr.bf16.mxu0 0
    %910 = vmatpush1.bf16.msra.mxu0 %v704
    %911 = vmatprep.subr.bf16.mxu0 0
    %912 = vmatpush1.bf16.msra.mxu0 %v705
    %913 = vmatprep.subr.bf16.mxu0 0
    %914 = vmatpush1.bf16.msra.mxu0 %v706
    %915 = vmatprep.mubr.bf16.mxu0 %v259
    %916 = vmatmul.mubr.bf16.gmra.mrb[0].mxu0 %v245
    %v917 = vpop.f32.mrb[0].mxu0
    %v918 = vadd.f32 %v218, %v917
    %v919 = vpop.f32.mrb[0].mxu0
    %v920 = vpop.f32.mrb[0].mxu0
    %v921 = vpop.f32.mrb[0].mxu0
    %922 = vdwg.mxu0
    %923 = vmatprep.subr.bf16.mxu0 0
    %924 = vmatpush1.bf16.msra.mxu0 %v707
    %925 = vmatprep.subr.bf16.mxu0 0
    %926 = vmatpush1.bf16.msra.mxu0 %v708
    %927 = vmatprep.subr.bf16.mxu0 0
    %928 = vmatpush1.bf16.msra.mxu0 %v709
    %929 = vmatprep.subr.bf16.mxu0 0
    %930 = vmatpush1.bf16.msra.mxu0 %v710
    %931 = vmatprep.subr.bf16.mxu0 0
    %932 = vmatpush1.bf16.msra.mxu0 %v711
    %933 = vmatprep.subr.bf16.mxu0 0
    %934 = vmatpush1.bf16.msra.mxu0 %v712
    %935 = vmatprep.subr.bf16.mxu0 0
    %936 = vmatpush1.bf16.msra.mxu0 %v713
    %937 = vmatprep.subr.bf16.mxu0 0
    %938 = vmatpush1.bf16.msra.mxu0 %v714
    %939 = vmatprep.subr.bf16.mxu0 0
    %940 = vmatpush1.bf16.msra.mxu0 %v715
    %941 = vmatprep.subr.bf16.mxu0 0
    %942 = vmatpush1.bf16.msra.mxu0 %v716
    %943 = vmatprep.subr.bf16.mxu0 0
    %944 = vmatpush1.bf16.msra.mxu0 %v717
    %945 = vmatprep.subr.bf16.mxu0 0
    %946 = vmatpush1.bf16.msra.mxu0 %v718
    %947 = vmatprep.subr.bf16.mxu0 0
    %948 = vmatpush1.bf16.msra.mxu0 %v719
    %949 = vmatprep.subr.bf16.mxu0 0
    %950 = vmatpush1.bf16.msra.mxu0 %v720
    %951 = vmatprep.subr.bf16.mxu0 0
    %952 = vmatpush1.bf16.msra.mxu0 %v721
    %953 = vmatprep.subr.bf16.mxu0 0
    %954 = vmatpush1.bf16.msra.mxu0 %v722
    %955 = vmatprep.mubr.bf16.mxu0 %v269
    %956 = vmatmul.mubr.bf16.gmra.mrb[0].mxu0 %v267
    %v957 = vpop.f32.mrb[0].mxu0
    %v958 = vadd.f32 %v918, %v957
    %v959 = vpop.f32.mrb[0].mxu0
    %v960 = vpop.f32.mrb[0].mxu0
    %v961 = vpop.f32.mrb[0].mxu0
    %962 = vdwg.mxu0
    %963 = vmatprep.subr.bf16.mxu0 0
    %964 = vmatpush1.bf16.msra.mxu0 %v723
    %965 = vmatprep.subr.bf16.mxu0 0
    %966 = vmatpush1.bf16.msra.mxu0 %v724
    %967 = vmatprep.subr.bf16.mxu0 0
    %968 = vmatpush1.bf16.msra.mxu0 %v725
    %969 = vmatprep.subr.bf16.mxu0 0
    %970 = vmatpush1.bf16.msra.mxu0 %v726
    %971 = vmatprep.subr.bf16.mxu0 0
    %972 = vmatpush1.bf16.msra.mxu0 %v727
    %973 = vmatprep.subr.bf16.mxu0 0
    %974 = vmatpush1.bf16.msra.mxu0 %v728
    %975 = vmatprep.subr.bf16.mxu0 0
    %976 = vmatpush1.bf16.msra.mxu0 %v729
    %977 = vmatprep.subr.bf16.mxu0 0
    %978 = vmatpush1.bf16.msra.mxu0 %v730
    %979 = vmatprep.subr.bf16.mxu0 0
    %980 = vmatpush1.bf16.msra.mxu0 %v731
    %981 = vmatprep.subr.bf16.mxu0 0
    %982 = vmatpush1.bf16.msra.mxu0 %v732
    %983 = vmatprep.subr.bf16.mxu0 0
    %984 = vmatpush1.bf16.msra.mxu0 %v733
    %985 = vmatprep.subr.bf16.mxu0 0
    %986 = vmatpush1.bf16.msra.mxu0 %v734
    %987 = vmatprep.subr.bf16.mxu0 0
    %988 = vmatpush1.bf16.msra.mxu0 %v735
    %989 = vmatprep.subr.bf16.mxu0 0
    %990 = vmatpush1.bf16.msra.mxu0 %v736
    %991 = vmatprep.subr.bf16.mxu0 0
    %992 = vmatpush1.bf16.msra.mxu0 %v737
    %993 = vmatprep.subr.bf16.mxu0 0
    %994 = vmatpush1.bf16.msra.mxu0 %v738
    %995 = vmatprep.mubr.bf16.mxu0 %v266
    %996 = vmatmul.mubr.bf16.gmra.mrb[0].mxu0 %v252
    %v997 = vpop.f32.mrb[0].mxu0
    %v998 = vadd.f32 %v958, %v997
    %v999 = vpop.f32.mrb[0].mxu0
    %v1000 = vpop.f32.mrb[0].mxu0
    %v1001 = vpop.f32.mrb[0].mxu0
    %1002 = vdwg.mxu0
    %1003 = vmatprep.subr.bf16.mxu0 0
    %1004 = vmatpush1.bf16.msra.mxu0 %v739
    %1005 = vmatprep.subr.bf16.mxu0 0
    %1006 = vmatpush1.bf16.msra.mxu0 %v740
    %1007 = vmatprep.subr.bf16.mxu0 0
    %1008 = vmatpush1.bf16.msra.mxu0 %v741
    %1009 = vmatprep.subr.bf16.mxu0 0
    %1010 = vmatpush1.bf16.msra.mxu0 %v742
    %1011 = vmatprep.subr.bf16.mxu0 0
    %1012 = vmatpush1.bf16.msra.mxu0 %v743
    %1013 = vmatprep.subr.bf16.mxu0 0
    %1014 = vmatpush1.bf16.msra.mxu0 %v744
    %1015 = vmatprep.subr.bf16.mxu0 0
    %1016 = vmatpush1.bf16.msra.mxu0 %v745
    %1017 = vmatprep.subr.bf16.mxu0 0
    %1018 = vmatpush1.bf16.msra.mxu0 %v746
    %1019 = vmatprep.subr.bf16.mxu0 0
    %1020 = vmatpush1.bf16.msra.mxu0 %v747
    %1021 = vmatprep.subr.bf16.mxu0 0
    %1022 = vmatpush1.bf16.msra.mxu0 %v748
    %1023 = vmatprep.subr.bf16.mxu0 0
    %1024 = vmatpush1.bf16.msra.mxu0 %v749
    %1025 = vmatprep.subr.bf16.mxu0 0
    %1026 = vmatpush1.bf16.msra.mxu0 %v750
    %1027 = vmatprep.subr.bf16.mxu0 0
    %1028 = vmatpush1.bf16.msra.mxu0 %v751
    %1029 = vmatprep.subr.bf16.mxu0 0
    %1030 = vmatpush1.bf16.msra.mxu0 %v752
    %1031 = vmatprep.subr.bf16.mxu0 0
    %1032 = vmatpush1.bf16.msra.mxu0 %v753
    %1033 = vmatprep.subr.bf16.mxu0 0
    %1034 = vmatpush1.bf16.msra.mxu0 %v754
    %1035 = vmatprep.mubr.bf16.mxu0 %v270
    %1036 = vmatmul.mubr.bf16.gmra.mrb[0].mxu0 %v268
    %v1037 = vpop.f32.mrb[0].mxu0
    %v1038 = vadd.f32 %v998, %v1037
    %v1039 = vpop.f32.mrb[0].mxu0
    %v1040 = vpop.f32.mrb[0].mxu0
    %v1041 = vpop.f32.mrb[0].mxu0
    %1042 = vdwg.mxu0
    %1043 = vmatprep.subr.bf16.mxu0 0
    %1044 = vmatpush1.bf16.msra.mxu0 %v755
    %1045 = vmatprep.subr.bf16.mxu0 0
    %1046 = vmatpush1.bf16.msra.mxu0 %v756
    %1047 = vmatprep.subr.bf16.mxu0 0
    %1048 = vmatpush1.bf16.msra.mxu0 %v757
    %1049 = vmatprep.subr.bf16.mxu0 0
    %1050 = vmatpush1.bf16.msra.mxu0 %v758
    %1051 = vmatprep.subr.bf16.mxu0 0
    %1052 = vmatpush1.bf16.msra.mxu0 %v759
    %1053 = vmatprep.subr.bf16.mxu0 0
    %1054 = vmatpush1.bf16.msra.mxu0 %v760
    %1055 = vmatprep.subr.bf16.mxu0 0
    %1056 = vmatpush1.bf16.msra.mxu0 %v761
    %1057 = vmatprep.subr.bf16.mxu0 0
    %1058 = vmatpush1.bf16.msra.mxu0 %v762
    %1059 = vmatprep.subr.bf16.mxu0 0
    %1060 = vmatpush1.bf16.msra.mxu0 %v763
    %1061 = vmatprep.subr.bf16.mxu0 0
    %1062 = vmatpush1.bf16.msra.mxu0 %v764
    %1063 = vmatprep.subr.bf16.mxu0 0
    %1064 = vmatpush1.bf16.msra.mxu0 %v765
    %1065 = vmatprep.subr.bf16.mxu0 0
    %1066 = vmatpush1.bf16.msra.mxu0 %v766
    %1067 = vmatprep.subr.bf16.mxu0 0
    %1068 = vmatpush1.bf16.msra.mxu0 %v767
    %1069 = vmatprep.subr.bf16.mxu0 0
    %1070 = vmatpush1.bf16.msra.mxu0 %v768
    %1071 = vmatprep.subr.bf16.mxu0 0
    %1072 = vmatpush1.bf16.msra.mxu0 %v769
    %1073 = vmatprep.subr.bf16.mxu0 0
    %1074 = vmatpush1.bf16.msra.mxu0 %v770
    %1075 = vmatprep.mubr.bf16.mxu0 %v292
    %1076 = vmatmul.mubr.bf16.gmra.mrb[0].mxu0 %v285
    %v1077 = vpop.f32.mrb[0].mxu0
    %v1078 = vadd.f32 %v1038, %v1077
    %v1079 = vpop.f32.mrb[0].mxu0
    %v1080 = vpop.f32.mrb[0].mxu0
    %v1081 = vpop.f32.mrb[0].mxu0
    %1082 = vdwg.mxu0
    %1083 = vmatprep.subr.bf16.mxu0 0
    %1084 = vmatpush1.bf16.msra.mxu0 %v771
    %1085 = vmatprep.subr.bf16.mxu0 0
    %1086 = vmatpush1.bf16.msra.mxu0 %v772
    %1087 = vmatprep.subr.bf16.mxu0 0
    %1088 = vmatpush1.bf16.msra.mxu0 %v773
    %1089 = vmatprep.subr.bf16.mxu0 0
    %1090 = vmatpush1.bf16.msra.mxu0 %v774
    %1091 = vmatprep.subr.bf16.mxu0 0
    %1092 = vmatpush1.bf16.msra.mxu0 %v775
    %1093 = vmatprep.subr.bf16.mxu0 0
    %1094 = vmatpush1.bf16.msra.mxu0 %v776
    %1095 = vmatprep.subr.bf16.mxu0 0
    %1096 = vmatpush1.bf16.msra.mxu0 %v777
    %1097 = vmatprep.subr.bf16.mxu0 0
    %1098 = vmatpush1.bf16.msra.mxu0 %v778
    %1099 = vmatprep.subr.bf16.mxu0 0
    %1100 = vmatpush1.bf16.msra.mxu0 %v779
    %1101 = vmatprep.subr.bf16.mxu0 0
    %1102 = vmatpush1.bf16.msra.mxu0 %v780
    %1103 = vmatprep.subr.bf16.mxu0 0
    %1104 = vmatpush1.bf16.msra.mxu0 %v781
    %1105 = vmatprep.subr.bf16.mxu0 0
    %1106 = vmatpush1.bf16.msra.mxu0 %v782
    %1107 = vmatprep.subr.bf16.mxu0 0
    %1108 = vmatpush1.bf16.msra.mxu0 %v783
    %1109 = vmatprep.subr.bf16.mxu0 0
    %1110 = vmatpush1.bf16.msra.mxu0 %v784
    %1111 = vmatprep.subr.bf16.mxu0 0
    %1112 = vmatpush1.bf16.msra.mxu0 %v785
    %1113 = vmatprep.subr.bf16.mxu0 0
    %1114 = vmatpush1.bf16.msra.mxu0 %v786
    %1115 = vmatprep.mubr.bf16.mxu0 %v294
    %1116 = vmatmul.mubr.bf16.gmra.mrb[0].mxu0 %v293
    %v1117 = vpop.f32.mrb[0].mxu0
    %v1118 = vadd.f32 %v1078, %v1117
    %v1119 = vpop.f32.mrb[0].mxu0
    %v1120 = vpop.f32.mrb[0].mxu0
    %v1121 = vpop.f32.mrb[0].mxu0
    %1122 = vdwg.mxu0
    %v1123 = vmax.f32 %v1118, 0.0
    %v1124 = vld [vmem:[%s3] sm:$0xff]
    %v1125 = vld [vmem:[%s3 + $0x8] sm:$0xff]
    %v1126 = vld [vmem:[%s3 + $0x10] sm:$0xff]
    %v1127 = vld [vmem:[%s3 + $0x18] sm:$0xff]
    %v1128 = vld [vmem:[%s3 + $0x20] sm:$0xff]
    %v1129 = vld [vmem:[%s3 + $0x28] sm:$0xff]
    %v1130 = vld [vmem:[%s3 + $0x30] sm:$0xff]
    %v1131 = vld [vmem:[%s3 + $0x38] sm:$0xff]
    %1132 = vrot.lane.b32.xlu0 %v218, 64
    %v1133 = vpop.permute.xlu0 %1132
    %vm1135 = vcmask 523264
    %v1137 = vsel %vm1135, %v1123, 0
    %1139 = vmatprep.subr.mxu0 0.0
    %1140 = vmatpush1.msra.mxu0 %v1124
    %1141 = vmatprep.subr.mxu0 0.0
    %1142 = vmatpush1.msra.mxu0 %v1125
    %1143 = vmatprep.subr.mxu0 0.0
    %1144 = vmatpush1.msra.mxu0 %v1126
    %1145 = vmatprep.subr.mxu0 0.0
    %1146 = vmatpush1.msra.mxu0 %v1127
    %1147 = vmatprep.subr.mxu0 0.0
    %1148 = vmatpush1.msra.mxu0 %v1128
    %1149 = vmatprep.subr.mxu0 0.0
    %1150 = vmatpush1.msra.mxu0 %v1129
    %1151 = vmatprep.subr.mxu0 0.0
    %1152 = vmatpush1.msra.mxu0 %v1130
    %1153 = vmatprep.subr.mxu0 0.0
    %1154 = vmatpush1.msra.mxu0 %v1131
    %1155 = vmatprep.subr.mxu0 0.0
    %1156 = vmatpush1.msra.mxu0 0.0
    %1157 = vmatprep.subr.mxu0 0.0
    %1158 = vmatpush1.msra.mxu0 0.0
    %1159 = vmatprep.subr.mxu0 0.0
    %1160 = vmatpush1.msra.mxu0 0.0
    %1161 = vmatprep.subr.mxu0 0.0
    %1162 = vmatpush1.msra.mxu0 0.0
    %1163 = vmatprep.subr.mxu0 0.0
    %1164 = vmatpush1.msra.mxu0 0.0
    %1165 = vmatprep.subr.mxu0 0.0
    %1166 = vmatpush1.msra.mxu0 0.0
    %1167 = vmatprep.subr.mxu0 0.0
    %1168 = vmatpush1.msra.mxu0 0.0
    %1169 = vmatprep.subr.mxu0 0.0
    %1170 = vmatpush1.msra.mxu0 0.0
    %1171 = vmatprep.subr.mxu0 0.0
    %1172 = vmatpush1.msra.mxu0 0.0
    %1173 = vmatprep.subr.mxu0 0.0
    %1174 = vmatpush1.msra.mxu0 0.0
    %1175 = vmatprep.subr.mxu0 0.0
    %1176 = vmatpush1.msra.mxu0 0.0
    %1177 = vmatprep.subr.mxu0 0.0
    %1178 = vmatpush1.msra.mxu0 0.0
    %1179 = vmatprep.subr.mxu0 0.0
    %1180 = vmatpush1.msra.mxu0 0.0
    %1181 = vmatprep.subr.mxu0 0.0
    %1182 = vmatpush1.msra.mxu0 0.0
    %1183 = vmatprep.subr.mxu0 0.0
    %1184 = vmatpush1.msra.mxu0 0.0
    %1185 = vmatprep.subr.mxu0 0.0
    %1186 = vmatpush1.msra.mxu0 0.0
    %1187 = vmatprep.subr.mxu0 0.0
    %1188 = vmatpush1.msra.mxu0 0.0
    %1189 = vmatprep.subr.mxu0 0.0
    %1190 = vmatpush1.msra.mxu0 0.0
    %1191 = vmatprep.subr.mxu0 0.0
    %1192 = vmatpush1.msra.mxu0 0.0
    %1193 = vmatprep.subr.mxu0 0.0
    %1194 = vmatpush1.msra.mxu0 0.0
    %1195 = vmatprep.subr.mxu0 0.0
    %1196 = vmatpush1.msra.mxu0 0.0
    %1197 = vmatprep.subr.mxu0 0.0
    %1198 = vmatpush1.msra.mxu0 0.0
    %1199 = vmatprep.subr.mxu0 0.0
    %1200 = vmatpush1.msra.mxu0 0.0
    %1201 = vmatprep.subr.mxu0 0.0
    %1202 = vmatpush1.msra.mxu0 0.0
    %1203 = vmatprep.mubr.f32.mxu0 0.0
    %1204 = vmatmul.mubr.f32.gmra.mrb[0].mxu0 %v1137
    %v1205 = vpop.f32.mrb[0].mxu0
    %v1206 = vadd.f32 %v1133, %v1205
    %v1207 = vpop.f32.mrb[0].mxu0
    %1208 = vdwg.mxu0
    %vm1209 = vcmask 123904
    %1210 = vst.msk [vmem:[#allocation2] sm:$0x3] %vm1209, %v1206
    // Predicated region
    $region18: #{run_neck.1} parent=1 // pred_check
      _
    $region19: #{run_neck.1} parent=1 // pred_check_branch
      %1212 = sbr.rel (0) target = $region21
    $region20: #{run_neck.1} parent=1 // pred_region
      %s1214 = ssub.s32 32, 32
      %1215 = vsyncadd [#allocation3], %s1214
      %s1217 = sshll.u32 [#allocation2], 4
      %s1218 = int_to_ptr.vmem [resolvable:$true] %s1217
      %1220 = dma.vmem_to_hbm [thread:$0]  %s1218, 32, %s4, [#allocation3]
    $region21: #{run_neck.1} parent=1 // pred_fallthru
      _
    // Predicated region
    $region22: #{run_neck.1} parent=1 // pred_check
      _
    $region23: #{run_neck.1} parent=1 // pred_check_branch
      %1222 = sbr.rel (0) target = $region25
    $region24: #{run_neck.1} parent=1 // pred_region
      %1223 = dma.done [#allocation3], 32
    $region25: #{run_neck.1} parent=1 // pred_fallthru
      _
    %1224 = vsyncpa [#allocation3], 1

</llo_original>
